<compile_context>
chip_gen: v6e
topology: v6e:2x2x1
jax: 0.10.0
libtpu: 0.0.40
codegen_flags: <defaults>
</compile_context>

<pallas_src>
import functools

import jax
import jax.numpy as jnp
from jax.experimental import pallas as pl
from jax.experimental.pallas import tpu as pltpu

LN_EPS = 1e-5


def _round_up(a, b):
    return ((a + b - 1) // b) * b


def _choose_tile_m(m, cap):
    """Largest multiple-of-16 (fallback 8) divisor of m that is <= cap.

    Prefers divisors giving an even block count so the grid splits evenly across
    the two TensorCores on v7x (harmless on v5e/v6e). Returns None if m has no
    aligned divisor; the caller then falls back to row padding + a row slice."""
    cap = max(int(cap), 16)
    for align in (16, 8):
        divisors = [d for d in range(align, min(cap, m) + 1, align) if m % d == 0]
        if not divisors:
            continue
        even = [d for d in divisors if (m // d) % 2 == 0]
        return max(even) if even else max(divisors)
    return None


def _patch_embed_ln_kernel(x_ref, w_ref, p_ref, o_ref, *, eps, inv_n):
    """(TM, K) @ (K, E) -> + bias -> LayerNorm over E -> gamma/beta affine.

    f32 MXU accumulation and f32 LayerNorm statistics; output stored in o_ref.dtype
    (bf16 by default). p_ref holds [bias; gamma; beta] stacked as (3, E) f32."""
    acc = jnp.dot(x_ref[...], w_ref[...], preferred_element_type=jnp.float32)
    params = p_ref[...]                               # (3, E) f32
    acc = acc + params[0:1, :]                        # bias
    # One-pass moments over the true embed dim (no padded columns -> no masking).
    mean = jnp.sum(acc, axis=-1, keepdims=True) * inv_n
    mean_sq = jnp.sum(acc * acc, axis=-1, keepdims=True) * inv_n
    var = jnp.maximum(mean_sq - mean * mean, 0.0)
    normed = (acc - mean) * jax.lax.rsqrt(var + eps)
    o_ref[...] = (normed * params[1:2, :] + params[2:3, :]).astype(o_ref.dtype)


@functools.partial(jax.jit,
                   static_argnames=("patch_size", "compute_dtype", "out_dtype", "tile_m"))
def swin_embeddings_forward(pixel_values, conv_weight, conv_bias, ln_gamma, ln_beta,
                            patch_size, *, compute_dtype=jnp.bfloat16, out_dtype=None,
                            tile_m=4096):
    """pixel_values: (B, C, H, W) float32 (H, W divisible by patch_size).
    conv_weight: (E, C, p, p); conv_bias/ln_gamma/ln_beta: (E,).
    Returns (embeddings (B, num_patches, E) in out_dtype, (H//p, W//p))."""
    B, C, H, W = pixel_values.shape
    p = patch_size
    E = conv_weight.shape[0]
    Hp, Wp = H // p, W // p
    num_patches = Hp * Wp
    K = C * p * p
    M = B * num_patches
    if out_dtype is None:
        out_dtype = compute_dtype

    # --- glue: patchify (== Conv2d with kernel=stride=patch), cast to compute dtype ---
    xv = pixel_values.astype(compute_dtype)
    x = xv.reshape(B, C, Hp, p, Wp, p)
    x = jnp.transpose(x, (0, 2, 4, 1, 3, 5)).reshape(M, K)       # (M, K), (C,ph,pw) order

    # Row tile: an aligned divisor of M when possible (no row padding, no slice copy).
    tm = _choose_tile_m(M, tile_m)
    if tm is None:
        tm = min(_round_up(M, 8), _round_up(int(tile_m), 8))
        m_pad = _round_up(M, tm)
        x = jnp.pad(x, ((0, m_pad - M), (0, 0)))
    else:
        m_pad = M

    w = conv_weight.reshape(E, K).T.astype(compute_dtype)        # (K, E), VMEM-resident
    params = jnp.stack([conv_bias, ln_gamma, ln_beta]).astype(jnp.float32)  # (3, E)

    kernel = functools.partial(_patch_embed_ln_kernel, eps=LN_EPS, inv_n=1.0 / float(E))
    grid = (m_pad // tm,)

    out = pl.pallas_call(
        kernel,
        out_shape=jax.ShapeDtypeStruct((m_pad, E), out_dtype),
        grid=grid,
        in_specs=[
            pl.BlockSpec((tm, K), lambda i: (i, 0)),     # patch rows: tiled over M
            pl.BlockSpec((K, E), lambda i: (0, 0)),      # weight: resident
            pl.BlockSpec((3, E), lambda i: (0, 0)),      # packed bias/gamma/beta
        ],
        out_specs=pl.BlockSpec((tm, E), lambda i: (i, 0)),
        compiler_params=pltpu.CompilerParams(
            dimension_semantics=("parallel",),
            vmem_limit_bytes=48 * 1024 * 1024,
        ),
    )(x, w, params)

    if m_pad != M:
        out = out[:M]
    embeddings = out.reshape(B, num_patches, E)                  # free when m_pad == M
    output_dimensions = (Hp, Wp)
    return embeddings, output_dimensions


def _reference(pixel_values, conv_weight, conv_bias, ln_gamma, ln_beta, patch_size):
    # Pure-JAX f32 reference (matches PyTorch Conv2d(k=stride=p) + LayerNorm).
    B, C, H, W = pixel_values.shape
    p = patch_size
    E = conv_weight.shape[0]
    Hp, Wp = H // p, W // p
    x = pixel_values.reshape(B, C, Hp, p, Wp, p)
    x = jnp.transpose(x, (0, 2, 4, 1, 3, 5)).reshape(B, Hp * Wp, C * p * p)
    proj = jnp.einsum("bnk,ek->bne", x, conv_weight.reshape(E, -1)) + conv_bias
    mean = proj.mean(-1, keepdims=True)
    var = ((proj - mean) ** 2).mean(-1, keepdims=True)
    normed = (proj - mean) / jnp.sqrt(var + LN_EPS)
    return normed * ln_gamma + ln_beta


if __name__ == "__main__":
    # Small synthetic config: batch=2, channels=4, image 16x16, patch=4, embed_dim=32
    B, C, H, W = 2, 4, 16, 16
    patch_size = 4
    embed_dim = 32

    key = jax.random.PRNGKey(0)
    k1, k2, k3, k4, k5 = jax.random.split(key, 5)
    pixel_values = jax.random.normal(k1, (B, C, H, W), dtype=jnp.float32)
    conv_weight = 0.1 * jax.random.normal(k2, (embed_dim, C, patch_size, patch_size),
                                          dtype=jnp.float32)
    conv_bias = 0.1 * jax.random.normal(k3, (embed_dim,), dtype=jnp.float32)
    ln_gamma = 1.0 + 0.05 * jax.random.normal(k4, (embed_dim,), dtype=jnp.float32)
    ln_beta = 0.05 * jax.random.normal(k5, (embed_dim,), dtype=jnp.float32)

    ref = _reference(pixel_values, conv_weight, conv_bias, ln_gamma, ln_beta, patch_size)
    num_patches = (H // patch_size) * (W // patch_size)

    # 1) f32 path: tight check of kernel structure (tiling, divisor tm, LN) vs reference.
    emb_f32, dims_f32 = swin_embeddings_forward(
        pixel_values, conv_weight, conv_bias, ln_gamma, ln_beta, patch_size,
        compute_dtype=jnp.float32)
    emb_f32 = jax.block_until_ready(emb_f32)
    assert emb_f32.shape == (B, num_patches, embed_dim)
    assert emb_f32.dtype == jnp.float32
    assert dims_f32 == (H // patch_size, W // patch_size)
    assert jnp.allclose(emb_f32, ref, atol=1e-4, rtol=1e-4)

    # 2) bf16 path (default perf config: bf16 operands + bf16 output, f32 LN stats).
    emb_bf16, dims_bf16 = swin_embeddings_forward(
        pixel_values, conv_weight, conv_bias, ln_gamma, ln_beta, patch_size)
    emb_bf16 = jax.block_until_ready(emb_bf16)
    assert emb_bf16.shape == (B, num_patches, embed_dim)
    assert emb_bf16.dtype == jnp.bfloat16
    assert dims_bf16 == (H // patch_size, W // patch_size)
    assert jnp.allclose(emb_bf16.astype(jnp.float32), ref, atol=3e-2, rtol=3e-2)

    print("KERNEL_OK")
</pallas_src>

<mosaic_0001>
module attributes {stable_mosaic.version = 11 : i64} {
  func.func @_patch_embed_ln_kernel(%arg0: i32, %arg1: memref<16x64xf32, #tpu.memory_space<vmem>>, %arg2: memref<64x32xf32, #tpu.memory_space<vmem>>, %arg3: memref<3x32xf32, #tpu.memory_space<vmem>>, %arg4: memref<16x32xf32, #tpu.memory_space<vmem>>) attributes {dimension_semantics = [#tpu.dimension_semantics<parallel>], iteration_bounds = array<i64: 2>, scalar_prefetch = 0 : i64, scratch_operands = 0 : i64, tpu.core_type = #tpu.core_type<tc>, window_params = [{transform_indices = @transform_0, window_bounds = array<i64: 16, 64>}, {pipeline_mode = #tpu.pipeline_mode<synchronous>, transform_indices = @transform_1, window_bounds = array<i64: 64, 32>}, {pipeline_mode = #tpu.pipeline_mode<synchronous>, transform_indices = @transform_2, window_bounds = array<i64: 3, 32>}, {transform_indices = @transform_3, window_bounds = array<i64: 16, 32>}]} {
    %c0 = arith.constant 0 : index
    %c0_0 = arith.constant 0 : index
    %0 = vector.load %arg1[%c0, %c0_0] : memref<16x64xf32, #tpu.memory_space<vmem>>, vector<16x64xf32>
    %c0_1 = arith.constant 0 : index
    %c0_2 = arith.constant 0 : index
    %1 = vector.load %arg2[%c0_1, %c0_2] : memref<64x32xf32, #tpu.memory_space<vmem>>, vector<64x32xf32>
    %cst = arith.constant dense<0.000000e+00> : vector<16x32xf32>
    %2 = tpu.matmul %0, %1, %cst {dimension_numbers = #tpu.dot_dimension_numbers<[1], [0], [0], [1], [0, 0, 1, 1], [], []>} : vector<16x64xf32>, vector<64x32xf32>, vector<16x32xf32> -> vector<16x32xf32>
    %c0_3 = arith.constant 0 : index
    %c0_4 = arith.constant 0 : index
    %3 = vector.load %arg3[%c0_3, %c0_4] : memref<3x32xf32, #tpu.memory_space<vmem>>, vector<3x32xf32>
    %4 = vector.extract_strided_slice %3 {offsets = [0, 0], sizes = [1, 32], strides = [1, 1]} : vector<3x32xf32> to vector<1x32xf32>
    %5 = vector.broadcast %4 : vector<1x32xf32> to vector<16x32xf32>
    %6 = arith.addf %2, %5 : vector<16x32xf32>
    %cst_5 = arith.constant dense<0.000000e+00> : vector<16xf32>
    %7 = vector.multi_reduction <add>, %6, %cst_5 [1] : vector<16x32xf32> to vector<16xf32>
    %8 = vector.shape_cast %7 : vector<16xf32> to vector<16x1xf32>
    %cst_6 = arith.constant 3.125000e-02 : f32
    %9 = vector.broadcast %cst_6 : f32 to vector<16x1xf32>
    %10 = arith.mulf %8, %9 : vector<16x1xf32>
    %11 = arith.mulf %6, %6 : vector<16x32xf32>
    %cst_7 = arith.constant dense<0.000000e+00> : vector<16xf32>
    %12 = vector.multi_reduction <add>, %11, %cst_7 [1] : vector<16x32xf32> to vector<16xf32>
    %13 = vector.shape_cast %12 : vector<16xf32> to vector<16x1xf32>
    %cst_8 = arith.constant 3.125000e-02 : f32
    %14 = vector.broadcast %cst_8 : f32 to vector<16x1xf32>
    %15 = arith.mulf %13, %14 : vector<16x1xf32>
    %16 = arith.mulf %10, %10 : vector<16x1xf32>
    %17 = arith.subf %15, %16 : vector<16x1xf32>
    %cst_9 = arith.constant 0.000000e+00 : f32
    %18 = vector.broadcast %cst_9 : f32 to vector<16x1xf32>
    %19 = arith.maximumf %17, %18 : vector<16x1xf32>
    %20 = vector.broadcast %10 : vector<16x1xf32> to vector<16x32xf32>
    %21 = arith.subf %6, %20 : vector<16x32xf32>
    %cst_10 = arith.constant 9.99999974E-6 : f32
    %22 = vector.broadcast %cst_10 : f32 to vector<16x1xf32>
    %23 = arith.addf %19, %22 : vector<16x1xf32>
    %24 = math.rsqrt %23 : vector<16x1xf32>
    %25 = vector.broadcast %24 : vector<16x1xf32> to vector<16x32xf32>
    %26 = arith.mulf %21, %25 : vector<16x32xf32>
    %27 = vector.extract_strided_slice %3 {offsets = [1, 0], sizes = [1, 32], strides = [1, 1]} : vector<3x32xf32> to vector<1x32xf32>
    %28 = vector.broadcast %27 : vector<1x32xf32> to vector<16x32xf32>
    %29 = arith.mulf %26, %28 : vector<16x32xf32>
    %30 = vector.extract_strided_slice %3 {offsets = [2, 0], sizes = [1, 32], strides = [1, 1]} : vector<3x32xf32> to vector<1x32xf32>
    %31 = vector.broadcast %30 : vector<1x32xf32> to vector<16x32xf32>
    %32 = arith.addf %29, %31 : vector<16x32xf32>
    %c0_11 = arith.constant 0 : index
    %c0_12 = arith.constant 0 : index
    %33 = vector.load %arg4[%c0_11, %c0_12] : memref<16x32xf32, #tpu.memory_space<vmem>>, vector<16x32xf32>
    tpu.vector_store %arg4[%c0_11, %c0_12], %32 {strides = array<i32>} : memref<16x32xf32, #tpu.memory_space<vmem>>, vector<16x32xf32>,
    return
  }
  func.func @transform_0(%arg0: i32) -> (i32, i32) {
    %c0_i32 = arith.constant 0 : i32
    %c0_i32_0 = arith.constant 0 : i32
    return %arg0, %c0_i32 : i32, i32
  }
  func.func @transform_1(%arg0: i32) -> (i32, i32) {
    %c0_i32 = arith.constant 0 : i32
    %c0_i32_0 = arith.constant 0 : i32
    %c0_i32_1 = arith.constant 0 : i32
    return %c0_i32, %c0_i32_0 : i32, i32
  }
  func.func @transform_2(%arg0: i32) -> (i32, i32) {
    %c0_i32 = arith.constant 0 : i32
    %c0_i32_0 = arith.constant 0 : i32
    %c0_i32_1 = arith.constant 0 : i32
    return %c0_i32, %c0_i32_0 : i32, i32
  }
  func.func @transform_3(%arg0: i32) -> (i32, i32) {
    %c0_i32 = arith.constant 0 : i32
    %c0_i32_0 = arith.constant 0 : i32
    return %arg0, %c0_i32 : i32, i32
  }
}

</mosaic_0001>

<llo_original>
// kernel: swin_embeddings_forward.1
$region0: #{swin_embeddings_forward.1}
  #allocation0 [shape = 'u32[]', space=smem, size = 0x4, offset = 0x4, fixed_abs, tag = 'smem constant byte address 0x4 - core index']
  #allocation1 [shape = 'u32[144,128]{1,0:T(1,128)}', space=vmem, size = 0x12000, scoped, tag = 'internal scratch']
  %s0 = inlined_call_operand.vmem [shape: f32[32,64], index: 0, kind: input, shape index: {}]
  %s1 = inlined_call_operand.vmem [shape: f32[64,32], index: 1, kind: input, shape index: {}]
  %s2 = inlined_call_operand.vmem [shape: f32[3,32], index: 2, kind: input, shape index: {}]
  %s3 = inlined_call_operand.hbm [shape: f32[32,32], index: 3, kind: output, shape index: {}]
  %s4 = sld [smem:[#allocation0]]
  $region45: #{swin_embeddings_forward.1} parent=0
    _
  %s6 = ssub.s32 1, %s4
  %s7 = scalar_select 0, %s6, %s4
  $region1: #{swin_embeddings_forward.1} parent=0
    #allocation2 [shape = 'u8[16384]{0}', space=vmem, size = 0x4000, scoped, tag = 'output window, operand 0']
    #allocation3 [shape = 's32[2]{0}', space=sflag, size = 0x8, scoped, tag = 'scoped memory for swin_embeddings_forward.1']
    %8 = vsyncpa [#allocation3], 0
    %s9 = scalar_lea.sflag [#allocation3], 1
    %10 = vsyncpa %s9, 0
    loop: start=0, step=1, limit=4
    $region2: #{swin_embeddings_forward.1} parent=1 // loop_pre_header
      _
    $region3: #{swin_embeddings_forward.1} parent=1 // loop_header
      %s12 = sphi 0, %s16
      %p13 = scmp.ge.s32.totalorder %s12, 4
      %s22 = sphi 0, %s24
      %s25 = sphi 0, %s22
      %s26 = sphi 0, %s25
      %s42 = sphi 0, %s26
      %s46 = sphi 0, %s46
      %s48 = sphi 0, %s46
      %s49 = sphi 0, %s48
      %s63 = sphi 0, %s49
      %s67 = sphi 0, %s67
      %s69 = sphi 0, %s67
      %s70 = sphi 0, %s69
      %s84 = sphi 0, %s70
      %s90 = sphi 0, %s92
      %s93 = sphi 0, %s90
      %s94 = sphi 0, %s93
      %s110 = sphi 0, %s94
    $region4: #{swin_embeddings_forward.1} parent=1 // loop_header_branch
      %15 = sbr.rel (%p13) target = $region8
    $region5: #{swin_embeddings_forward.1} parent=1 // loop_body
      %s17 = ssub.s32 %s12, 1
      %s18 = ssub.s32 %s12, 2
      %s19 = sadd.s32 %s12, 1
      %s20 = ssub.s32 %s12, %s19
      %p21 = scmp.eq.s32.totalorder %s20, 0
      %s23 = sadd.s32 %s22, 1
      %s24 = scalar_select %p21, %s22, %s23
      %p27 = pneg %p21
      %p28 = scmp.eq.s32.totalorder %s12, 1
      %p29 = por %p27, %p28
      %p30 = scmp.ne.s32.totalorder %s22, %s25
      %p31 = scmp.eq.s32.totalorder %s12, 0
      %p32 = por %p30, %p31
      %p33 = scmp.ne.s32.totalorder %s22, %s25
      %p34 = scmp.eq.s32.totalorder %s17, 1
      %p35 = por %p33, %p34
      %p36 = scmp.ne.s32.totalorder %s25, %s26
      %p37 = scmp.eq.s32.totalorder %s17, 0
      %p38 = por %p36, %p37
      %p39 = scmp.ne.s32.totalorder %s25, %s26
      %p40 = scmp.eq.s32.totalorder %s18, 1
      %p41 = por %p39, %p40
      %p43 = scmp.ne.s32.totalorder %s26, %s42
      %p44 = scmp.eq.s32.totalorder %s18, 0
      %p45 = por %p43, %p44
      %s47 = sadd.s32 %s46, 1
      %p50 = scmp.eq.s32.totalorder %s12, 1
      %p51 = scmp.ne.s32.totalorder %s46, %s48
      %p52 = scmp.eq.s32.totalorder %s12, 0
      %p53 = por %p51, %p52
      %p54 = scmp.ne.s32.totalorder %s46, %s48
      %p55 = scmp.eq.s32.totalorder %s17, 1
      %p56 = por %p54, %p55
      %p57 = scmp.ne.s32.totalorder %s48, %s49
      %p58 = scmp.eq.s32.totalorder %s17, 0
      %p59 = por %p57, %p58
      %p60 = scmp.ne.s32.totalorder %s48, %s49
      %p61 = scmp.eq.s32.totalorder %s18, 1
      %p62 = por %p60, %p61
      %p64 = scmp.ne.s32.totalorder %s49, %s63
      %p65 = scmp.eq.s32.totalorder %s18, 0
      %p66 = por %p64, %p65
      %s68 = sadd.s32 %s67, 1
      %p71 = scmp.eq.s32.totalorder %s12, 1
      %p72 = scmp.ne.s32.totalorder %s67, %s69
      %p73 = scmp.eq.s32.totalorder %s12, 0
      %p74 = por %p72, %p73
      %p75 = scmp.ne.s32.totalorder %s67, %s69
      %p76 = scmp.eq.s32.totalorder %s17, 1
      %p77 = por %p75, %p76
      %p78 = scmp.ne.s32.totalorder %s69, %s70
      %p79 = scmp.eq.s32.totalorder %s17, 0
      %p80 = por %p78, %p79
      %p81 = scmp.ne.s32.totalorder %s69, %s70
      %p82 = scmp.eq.s32.totalorder %s18, 1
      %p83 = por %p81, %p82
      %p85 = scmp.ne.s32.totalorder %s70, %s84
      %p86 = scmp.eq.s32.totalorder %s18, 0
      %p87 = por %p85, %p86
      %s88 = ssub.s32 %s12, %s19
      %p89 = scmp.eq.s32.totalorder %s88, 0
      %s91 = sadd.s32 %s90, 1
      %s92 = scalar_select %p89, %s90, %s91
      %p95 = pneg %p89
      %p96 = scmp.eq.s32.totalorder %s12, 1
      %p97 = por %p95, %p96
      %p98 = scmp.ne.s32.totalorder %s90, %s93
      %p99 = scmp.eq.s32.totalorder %s12, 0
      %p100 = por %p98, %p99
      %p101 = scmp.ne.s32.totalorder %s90, %s93
      %p102 = scmp.eq.s32.totalorder %s17, 1
      %p103 = por %p101, %p102
      %p104 = scmp.ne.s32.totalorder %s93, %s94
      %p105 = scmp.eq.s32.totalorder %s17, 0
      %p106 = por %p104, %p105
      %p107 = scmp.ne.s32.totalorder %s93, %s94
      %p108 = scmp.eq.s32.totalorder %s18, 1
      %p109 = por %p107, %p108
      %p111 = scmp.ne.s32.totalorder %s94, %s110
      %p112 = scmp.eq.s32.totalorder %s18, 0
      %p113 = por %p111, %p112
      %p114 = scmp.le.s32.totalorder 1, %s12
      %p115 = scmp.lt.s32.totalorder %s12, 3
      %p116 = pnand %p114, %p115
      %p117 = pneg %p116
      // Predicated region
      $region9: #{swin_embeddings_forward.1} parent=5 // pred_check
        _
      $region10: #{swin_embeddings_forward.1} parent=5 // pred_check_branch
        %119 = sbr.rel (%p116) target = $region12
      $region11: #{swin_embeddings_forward.1} parent=5 // pred_region
        %s120 = ssub.s32 %s12, 1
        // Predicated region
        $region13: #{swin_embeddings_forward.1} parent=11 // pred_check
          %p121 = pneg %p59
        $region14: #{swin_embeddings_forward.1} parent=11 // pred_check_branch
          %123 = sbr.rel (%p121) target = $region16
        $region15: #{swin_embeddings_forward.1} parent=11 // pred_region
          _
        $region16: #{swin_embeddings_forward.1} parent=11 // pred_fallthru
          _
        // Predicated region
        $region17: #{swin_embeddings_forward.1} parent=11 // pred_check
          %p124 = pneg %p80
        $region18: #{swin_embeddings_forward.1} parent=11 // pred_check_branch
          %126 = sbr.rel (%p124) target = $region20
        $region19: #{swin_embeddings_forward.1} parent=11 // pred_region
          _
        $region20: #{swin_embeddings_forward.1} parent=11 // pred_fallthru
          _
      $region12: #{swin_embeddings_forward.1} parent=5 // pred_fallthru
        _
      %p127 = scmp.lt.s32.totalorder %s12, 2
      // Predicated region
      $region21: #{swin_embeddings_forward.1} parent=5 // pred_check
        %p128 = pneg %p127
      $region22: #{swin_embeddings_forward.1} parent=5 // pred_check_branch
        %130 = sbr.rel (%p128) target = $region24
      $region23: #{swin_embeddings_forward.1} parent=5 // pred_region
        // Predicated region
        $region25: #{swin_embeddings_forward.1} parent=23 // pred_check
          %p131 = pneg %p32
        $region26: #{swin_embeddings_forward.1} parent=23 // pred_check_branch
          %133 = sbr.rel (%p131) target = $region28
        $region27: #{swin_embeddings_forward.1} parent=23 // pred_region
          %s134 = smul.u32 2, %s12
          %p135 = scmp.lt.s32.totalorder %s134, 3
          %s136 = scalar_select %p135, %s134, 3
          %s137 = smul.addr %s136, 8
          %s138 = scalar_lea.vmem %s0, %s137
          %s139 = smul.u32 2, %s12
        $region28: #{swin_embeddings_forward.1} parent=23 // pred_fallthru
          _
      $region24: #{swin_embeddings_forward.1} parent=5 // pred_fallthru
        _
      %p140 = scmp.le.s32.totalorder 1, %s12
      %p141 = scmp.lt.s32.totalorder %s12, 3
      %p142 = pnand %p140, %p141
      %p143 = pneg %p142
      // Predicated region
      $region29: #{swin_embeddings_forward.1} parent=5 // pred_check
        _
      $region30: #{swin_embeddings_forward.1} parent=5 // pred_check_branch
        %145 = sbr.rel (%p142) target = $region32
      $region31: #{swin_embeddings_forward.1} parent=5 // pred_region
        %s146 = ssub.s32 %s12, 1
        %s147 = smul.u32 2, %s17
        %p148 = scmp.lt.s32.totalorder %s147, 3
        %s149 = scalar_select %p148, %s147, 3
        %s150 = smul.addr %s149, 8
        %s151 = scalar_lea.vmem %s0, %s150
        %p152 = pneg %p38
        %p153 = pneg %p35
        %p154 = pneg %p59
        %p155 = pneg %p56
        %p156 = pneg %p80
        %p157 = pneg %p77
        %p158 = pneg %p106
        %p159 = pneg %p103
        %s160 = sand.u32 %s93, 1
        %s161 = scalar_lea.sflag [#allocation3], %s160
        %s162 = sand.u32 %s93, 1
        %s163 = smul.addr %s162, 16
        %s164 = scalar_lea.vmem [#allocation2], %s163
        %s165 = smul.u32 2, %s17
        %p166 = scmp.lt.s32.totalorder %s165, 3
        %s167 = scalar_select %p166, %s165, 3
        %s168 = smul.addr %s167, 8
        %s169 = scalar_lea.vmem %s0, %s168
        %s170 = smul.u32 2, %s17
        %s171 = smul.u32 2, %s17
        %v172 = vld [vmem:[%s169] sm:$0xff]
        %v173 = vld [vmem:[%s169 + $0x8] sm:$0xff]
        %v174 = vld [vmem:[%s1] sm:$0xff]
        %v175 = vld [vmem:[%s1 + $0x8] sm:$0xff]
        %v176 = vld [vmem:[%s1 + $0x10] sm:$0xff]
        %v177 = vld [vmem:[%s1 + $0x18] sm:$0xff]
        %v178 = vld [vmem:[%s1 + $0x20] sm:$0xff]
        %v179 = vld [vmem:[%s1 + $0x28] sm:$0xff]
        %v180 = vld [vmem:[%s1 + $0x30] sm:$0xff]
        %v181 = vld [vmem:[%s1 + $0x38] sm:$0xff]
        %v182 = vld [vmem:[%s2] sm:$0x7]
        %v183 = vlaneseq
        %v184 = vshrl.u32 %v183, 7
        %v185 = vsub.s32 0, %v184
        %v186 = vrot.slane %v182, %v185
        %vm187 = vcmask 523264
        %v189 = vsel %vm187, %v172, 0
        %v192 = vsel %vm187, %v173, 0
        %194 = vmatprep.subr.mxu0 0.0
        %195 = vmatpush1.msra.mxu0 0.0
        %196 = vmatprep.subr.mxu0 0.0
        %197 = vmatpush1.msra.mxu0 0.0
        %198 = vmatprep.subr.mxu0 0.0
        %199 = vmatpush1.msra.mxu0 0.0
        %200 = vmatprep.subr.mxu0 0.0
        %201 = vmatpush1.msra.mxu0 0.0
        %202 = vmatprep.subr.mxu0 0.0
        %203 = vmatpush1.msra.mxu0 0.0
        %204 = vmatprep.subr.mxu0 0.0
        %205 = vmatpush1.msra.mxu0 0.0
        %206 = vmatprep.subr.mxu0 0.0
        %207 = vmatpush1.msra.mxu0 0.0
        %208 = vmatprep.subr.mxu0 0.0
        %209 = vmatpush1.msra.mxu0 0.0
        %210 = vmatprep.subr.mxu0 0.0
        %211 = vmatpush1.msra.mxu0 %v181
        %212 = vmatprep.subr.mxu0 0.0
        %213 = vmatpush1.msra.mxu0 %v180
        %214 = vmatprep.subr.mxu0 0.0
        %215 = vmatpush1.msra.mxu0 %v179
        %216 = vmatprep.subr.mxu0 0.0
        %217 = vmatpush1.msra.mxu0 %v178
        %218 = vmatprep.subr.mxu0 0.0
        %219 = vmatpush1.msra.mxu0 %v177
        %220 = vmatprep.subr.mxu0 0.0
        %221 = vmatpush1.msra.mxu0 %v176
        %222 = vmatprep.subr.mxu0 0.0
        %223 = vmatpush1.msra.mxu0 %v175
        %224 = vmatprep.subr.mxu0 0.0
        %225 = vmatpush1.msra.mxu0 %v174
        %226 = vmatprep.subr.mxu0 0.0
        %227 = vmatpush2.msra.mxu0 0.0
        %228 = vmatprep.subr.mxu0 0.0
        %229 = vmatpush2.msra.mxu0 0.0
        %230 = vmatprep.subr.mxu0 0.0
        %231 = vmatpush2.msra.mxu0 0.0
        %232 = vmatprep.subr.mxu0 0.0
        %233 = vmatpush2.msra.mxu0 0.0
        %234 = vmatprep.subr.mxu0 0.0
        %235 = vmatpush2.msra.mxu0 0.0
        %236 = vmatprep.subr.mxu0 0.0
        %237 = vmatpush2.msra.mxu0 0.0
        %238 = vmatprep.subr.mxu0 0.0
        %239 = vmatpush2.msra.mxu0 0.0
        %240 = vmatprep.subr.mxu0 0.0
        %241 = vmatpush2.msra.mxu0 0.0
        %242 = vmatprep.subr.mxu0 0.0
        %243 = vmatpush2.msra.mxu0 0.0
        %244 = vmatprep.subr.mxu0 0.0
        %245 = vmatpush2.msra.mxu0 0.0
        %246 = vmatprep.subr.mxu0 0.0
        %247 = vmatpush2.msra.mxu0 0.0
        %248 = vmatprep.subr.mxu0 0.0
        %249 = vmatpush2.msra.mxu0 0.0
        %250 = vmatprep.subr.mxu0 0.0
        %251 = vmatpush2.msra.mxu0 0.0
        %252 = vmatprep.subr.mxu0 0.0
        %253 = vmatpush2.msra.mxu0 0.0
        %254 = vmatprep.subr.mxu0 0.0
        %255 = vmatpush2.msra.mxu0 0.0
        %256 = vmatprep.subr.mxu0 0.0
        %257 = vmatpush2.msra.mxu0 0.0
        %258 = vmatprep.mubr.f32.mxu0 0.0
        %259 = vmatmul.mubr.f32.gmra.mxu0 %v189
        %v260 = vpop.f32.mrf.mxu0
        %v261 = vadd.f32 %v186, %v260
        %v262 = vpop.f32.mrf.mxu0
        %263 = vmatprep.mubr.f32.mxu0 0.0
        %264 = vmatmul.mubr.f32.gmra.mxu0 %v192
        %v265 = vpop.f32.mrf.mxu0
        %v266 = vadd.f32 %v186, %v265
        %v267 = vpop.f32.mrf.mxu0
        %268 = vdwg.mxu0
        %vm269 = vcmask 261120
        %v270 = vsel %vm269, %v261, 0.0
        %271 = vadd.xlane.f32.xlu0 %v270
        %v272 = vpop.xlane.xlu0 %271
        %v273 = vsel %vm269, %v266, 0.0
        %274 = vadd.xlane.f32.xlu0 %v273
        %v275 = vpop.xlane.xlu0 %274
        %v276 = vmul.f32 %v272, 0.03125
        %v277 = vmul.f32 %v275, 0.03125
        %v278 = vmul.f32 %v261, %v261
        %v279 = vmul.f32 %v266, %v266
        %v280 = vsel %vm269, %v278, 0.0
        %281 = vadd.xlane.f32.xlu0 %v280
        %v282 = vpop.xlane.xlu0 %281
        %v283 = vsel %vm269, %v279, 0.0
        %284 = vadd.xlane.f32.xlu0 %v283
        %v285 = vpop.xlane.xlu0 %284
        %v286 = vmul.f32 %v282, 0.03125
        %v287 = vmul.f32 %v285, 0.03125
        %v288 = vmul.f32 %v276, %v276
        %v289 = vmul.f32 %v277, %v277
        %v290 = vsub.f32 %v286, %v288
        %v291 = vsub.f32 %v287, %v289
        %v292 = vmax.f32 %v290, 0.0
        %v293 = vmax.f32 %v291, 0.0
        %v294 = vsub.f32 %v261, %v276
        %v295 = vsub.f32 %v266, %v277
        %v296 = vadd.f32 %v292, 1e-05
        %v297 = vadd.f32 %v293, 1e-05
        %v298 = vrsqrt.pop %v296
        %v299 = vrsqrt.pop %v297
        %v300 = vmul.f32 %v294, %v298
        %v301 = vmul.f32 %v295, %v299
        %v302 = vlaneseq
        %v303 = vshrl.u32 %v302, 7
        %v304 = vsub.s32 1, %v303
        %v305 = vrot.slane %v182, %v304
        %v306 = vmul.f32 %v300, %v305
        %v307 = vmul.f32 %v301, %v305
        %v308 = vlaneseq
        %v309 = vshrl.u32 %v308, 7
        %v310 = vsub.s32 2, %v309
        %v311 = vrot.slane %v182, %v310
        %v312 = vadd.f32 %v306, %v311
        %v313 = vadd.f32 %v307, %v311
        %314 = vst.msk [vmem:[%s164] sm:$0xff] %vm269, %v312
        %315 = vst.msk [vmem:[%s164 + $0x8] sm:$0xff] %vm269, %v313
        %s316 = sand.u32 %s93, 1
        %s317 = scalar_lea.sflag [#allocation3], %s316
        %s318 = sand.u32 %s93, 1
        %s319 = smul.addr %s318, 16
        %s320 = scalar_lea.vmem [#allocation2], %s319
        // Predicated region
        $region33: #{swin_embeddings_forward.1} parent=31 // pred_check
          %p321 = pneg %p103
        $region34: #{swin_embeddings_forward.1} parent=31 // pred_check_branch
          %323 = sbr.rel (%p321) target = $region36
        $region35: #{swin_embeddings_forward.1} parent=31 // pred_region
          %s324 = smul.u32 2, %s17
          %s326 = ssub.s32 256, 256
          %327 = vsyncadd %s317, %s326
          %s328 = smul.addr %s324, 128
          %s329 = scalar_lea.hbm %s3, %s328
          %s330 = sshll.u32 %s320, 4
          %s331 = int_to_ptr.vmem [resolvable:$true] %s330
          %336 = dma.vmem_to_hbm [thread:$0]  %s331, 256, %s329, %s317, 128, 128, 8
        $region36: #{swin_embeddings_forward.1} parent=31 // pred_fallthru
          _
      $region32: #{swin_embeddings_forward.1} parent=5 // pred_fallthru
        _
      %p337 = scmp.le.s32.totalorder 2, %s12
      // Predicated region
      $region37: #{swin_embeddings_forward.1} parent=5 // pred_check
        %p338 = pneg %p337
      $region38: #{swin_embeddings_forward.1} parent=5 // pred_check_branch
        %340 = sbr.rel (%p338) target = $region40
      $region39: #{swin_embeddings_forward.1} parent=5 // pred_region
        %s341 = ssub.s32 %s12, 2
        // Predicated region
        $region41: #{swin_embeddings_forward.1} parent=39 // pred_check
          %p342 = pneg %p109
        $region42: #{swin_embeddings_forward.1} parent=39 // pred_check_branch
          %344 = sbr.rel (%p342) target = $region44
        $region43: #{swin_embeddings_forward.1} parent=39 // pred_region
          %s345 = sand.u32 %s94, 1
          %s346 = scalar_lea.sflag [#allocation3], %s345
          %s347 = sand.u32 %s94, 1
          %s348 = smul.addr %s347, 16
          %s349 = scalar_lea.vmem [#allocation2], %s348
          %350 = dma.done %s346, 256
        $region44: #{swin_embeddings_forward.1} parent=39 // pred_fallthru
          _
      $region40: #{swin_embeddings_forward.1} parent=5 // pred_fallthru
        _
    $region6: #{swin_embeddings_forward.1} parent=1 // loop_footer
      %s16 = sadd.s32 1, %s12
    $region7: #{swin_embeddings_forward.1} parent=1 // loop_footer_branch
      %11 = sbr.rel target = $region3
    $region8: #{swin_embeddings_forward.1} parent=1 // loop_exit
      _
    %351 = vsyncpa [#allocation3], 1
    %s352 = scalar_lea.sflag [#allocation3], 1
    %353 = vsyncpa %s352, 1

</llo_original>
